<compile_context>
chip_gen: v6e
topology: v6e:2x2x1
jax: 0.10.0
libtpu: 0.0.40
codegen_flags: <defaults>
</compile_context>

<pallas_src>
import functools

import jax
import jax.numpy as jnp
from jax import lax
from jax.experimental import pallas as pl
from jax.experimental.pallas import tpu as pltpu


def _round_up(x, m):
    return (x + m - 1) // m * m


def _choose_tiles(n, tm_pref=512, tk_pref=2048):
    """Pick (tm, tk, n_pad): tm = dst-row tile, tk = src reduction tile, both dividing
    n_pad >= n.  Never silently collapses to 128 for 'unlucky' n; the node dimension is
    padded up to a tile multiple instead (padding is zeros and contributes nothing)."""
    tm_pref = max(128, _round_up(tm_pref, 128))
    tk_pref = max(tm_pref, _round_up(tk_pref, tm_pref))
    n128 = _round_up(n, 128)
    if n128 <= min(tk_pref, 1024):          # small graph: a single tile each way
        return n128, n128, n128
    tm = tm_pref
    n_pad, tk = _round_up(n, tm), tm
    for g in range(tk_pref, tm, -tm):       # prefer the largest reduction tile that
        cand = _round_up(n, g)              # keeps extra padding under ~6%
        if cand * 16 <= n_pad * 17:
            n_pad, tk = cand, g
            break
    return tm, tk, n_pad


def _vmem_limit(nbytes):
    """vmem_limit_bytes derived from actual buffer sizes, clamped to the chip."""
    try:
        cap = int(pltpu.get_tpu_info().vmem_capacity_bytes)
    except Exception:
        cap = 64 * 1024 * 1024              # v7x physical; safe lower bound for v5e/v6e
    ceiling = cap * 7 // 8
    need = int(nbytes * 1.25) + (2 << 20)   # headroom for compiler temporaries
    return max(min(need, ceiling), min(32 << 20, ceiling))


def _block_spec(shape, index_map, buffers=None):
    """BlockSpec, optionally with a deeper pipeline; falls back cleanly if the running
    JAX version does not support pipeline_mode."""
    if buffers is not None and hasattr(pl, "Buffered"):
        try:
            return pl.BlockSpec(shape, index_map, pipeline_mode=pl.Buffered(buffers))
        except TypeError:
            pass
    return pl.BlockSpec(shape, index_map)


def _prep_adj_kernel(adj_ref, adj_out_ref, deg_ref, *, n, masked):
    """Single streamed pass over the raw f32 adjacency: zero-pad + cast to bf16 and
    accumulate the in-degree column sums.  grid = (dst tiles, src tiles)."""
    i = pl.program_id(0)                    # dst / column tile  (parallel)
    s = pl.program_id(1)                    # src / row tile     (reduction, last)
    tr, tc = adj_ref.shape

    @pl.when(s == 0)
    def _():
        deg_ref[...] = jnp.zeros_like(deg_ref)

    a = adj_ref[...]
    if masked:                              # edge tiles straddle the real (n, n) extent
        rows = s * tr + lax.broadcasted_iota(jnp.int32, (tr, tc), 0)
        cols = i * tc + lax.broadcasted_iota(jnp.int32, (tr, tc), 1)
        a = jnp.where((rows < n) & (cols < n), a, 0.0)
    adj_out_ref[...] = a.astype(adj_out_ref.dtype)
    deg_ref[...] += jnp.sum(a, axis=0, keepdims=True)


def _project_kernel(feat_ref, norm_ref, w_ref, b_ref, x_ref):
    """x = (feat * norm) @ W^T + b for one row tile (in_feats > k branch).
    Elementwise + matmul in f32 (v5e-safe); emitted as bf16 for the aggregation."""
    xn = feat_ref[...] * norm_ref[...]
    h = jnp.dot(xn, w_ref[...], preferred_element_type=jnp.float32) + b_ref[...]
    x_ref[...] = h.astype(x_ref.dtype)


def _agg_kernel(adj_ref, x_ref, norm_ref, *rest, apply_w):
    """acc += adj_tile^T @ x_tile (bf16 x bf16 -> f32 acc); finalize applies the
    optional Linear (in_feats <= k branch) and the dst-side norm, all in f32."""
    if apply_w:
        w_ref, b_ref, out_ref, acc_ref = rest
    else:
        out_ref, acc_ref = rest
    s = pl.program_id(1)
    tk = adj_ref.shape[0]

    @pl.when(s == 0)
    def _():
        acc_ref[...] = jnp.zeros_like(acc_ref)

    # adj tile is (tk src, tm dst); contract its src axis against the VMEM-resident
    # bf16 feature table -> (tm, C).  This folds A^T into the matmul, so no transposed
    # adjacency is ever materialized.  bf16 operands, f32 accumulation on the MXU.
    src0 = pl.multiple_of(s * tk, tk)
    x = x_ref[pl.ds(src0, tk), :]
    acc_ref[...] += lax.dot_general(
        adj_ref[...], x, dimension_numbers=(((0,), (0,)), ((), ())),
        preferred_element_type=jnp.float32)

    @pl.when(s == pl.num_programs(1) - 1)
    def _():
        r = acc_ref[...]
        if apply_w:                         # in_feats <= k: Linear after aggregation
            r = jnp.dot(r, w_ref[...], preferred_element_type=jnp.float32) + b_ref[...]
        out_ref[...] = (r * norm_ref[...]).astype(out_ref.dtype)


def diff_pooling(adj, feat, weight, bias, k, *, tm=512, tk=2048):
    """adj: (N, N) with adj[src, dst] = 1 for edge src->dst; feat: (N, F);
    weight: (k, F) (nn.Linear layout); bias: (k,).  Returns (N, k) float32."""
    N, F = feat.shape
    adj = adj.astype(jnp.float32)
    feat = feat.astype(jnp.float32)
    weight = weight.astype(jnp.float32)
    bias = bias.astype(jnp.float32)

    tm, tk, N_pad = _choose_tiles(N, tm, tk)
    F_pad = _round_up(F, 128)
    K_pad = _round_up(k, 128)               # lane-dense output (k=8 would hit vst.msk)

    # ---- Pass 1: fused zero-pad + bf16 cast + in-degree (reads adj exactly once) ----
    last_r, last_c = (N - 1) // tk, (N - 1) // tm    # clamp edge blocks into bounds
    prep_bytes = 2 * tk * tm * (4 + 2) + 2 * tm * 4
    adj_p, in_deg = pl.pallas_call(
        functools.partial(_prep_adj_kernel, n=N, masked=(N_pad != N)),
        out_shape=(jax.ShapeDtypeStruct((N_pad, N_pad), jnp.bfloat16),
                   jax.ShapeDtypeStruct((1, N_pad), jnp.float32)),
        grid=(N_pad // tm, N_pad // tk),
        in_specs=[pl.BlockSpec(
            (tk, tm), lambda i, s: (jnp.minimum(s, last_r), jnp.minimum(i, last_c)))],
        out_specs=(pl.BlockSpec((tk, tm), lambda i, s: (s, i)),
                   pl.BlockSpec((1, tm), lambda i, s: (0, i))),
        compiler_params=pltpu.CompilerParams(
            dimension_semantics=("parallel", "arbitrary"),
            vmem_limit_bytes=_vmem_limit(prep_bytes)),
    )(adj)

    # Symmetric GCN norm; padded columns have degree 0 -> clamp -> 1 (harmless, sliced).
    norm = jnp.power(jnp.maximum(in_deg, 1.0), -0.5).reshape(N_pad, 1)

    w_p = jnp.pad(weight.T, ((0, F_pad - F), (0, K_pad - k)))
    b_p = jnp.pad(bias.reshape(1, k), ((0, 0), (0, K_pad - k)))

    project_first = F > k
    if project_first:
        # Hoisted projection with its own small row tile + VMEM budget; bf16 output so
        # the aggregation runs at bf16 MXU rate with half the resident-table VMEM.
        tp = 128
        feat_p = jnp.pad(feat, ((0, N_pad - N), (0, F_pad - F)))   # O(N*F), tiny vs N^2
        proj_bytes = 2 * (tp * F_pad * 4 + tp * 4 + F_pad * K_pad * 4
                          + K_pad * 4 + tp * K_pad * 2)
        x_res = pl.pallas_call(
            _project_kernel,
            out_shape=jax.ShapeDtypeStruct((N_pad, K_pad), jnp.bfloat16),
            grid=(N_pad // tp,),
            in_specs=[pl.BlockSpec((tp, F_pad), lambda i: (i, 0)),
                      pl.BlockSpec((tp, 1), lambda i: (i, 0)),
                      pl.BlockSpec((F_pad, K_pad), lambda i: (0, 0)),
                      pl.BlockSpec((1, K_pad), lambda i: (0, 0))],
            out_specs=pl.BlockSpec((tp, K_pad), lambda i: (i, 0)),
            compiler_params=pltpu.CompilerParams(
                dimension_semantics=("parallel",),
                vmem_limit_bytes=_vmem_limit(proj_bytes)),
        )(feat_p, norm, w_p, b_p)
        C = K_pad
    else:
        # in_feats <= k: aggregate first, Linear is fused into the agg finalize.
        xn = (feat * norm[:N]).astype(jnp.bfloat16)                # O(N*F), tiny vs N^2
        x_res = jnp.pad(xn, ((0, N_pad - N), (0, F_pad - F)))
        C = F_pad

    # ---- Pass 2: rst = (A^T @ x) [@ W + b] * norm, streaming bf16 adj tiles ----
    in_specs = [
        _block_spec((tk, tm), lambda i, s: (s, i), buffers=3),   # adj, deeper pipeline
        pl.BlockSpec((N_pad, C), lambda i, s: (0, 0)),           # resident bf16 x table
        pl.BlockSpec((tm, 1), lambda i, s: (i, 0)),              # dst-side norm
    ]
    operands = [adj_p, x_res, norm]
    if not project_first:
        in_specs += [pl.BlockSpec((F_pad, K_pad), lambda i, s: (0, 0)),
                     pl.BlockSpec((1, K_pad), lambda i, s: (0, 0))]
        operands += [w_p, b_p]

    # TODO(synk): for very large N on v7x (64 MiB VMEM) the resident x table should be
    # single-buffered (pl.Buffered(1) or a one-shot manual copy); with the bf16 table it
    # fits comfortably for any N whose dense adjacency fits in HBM, so the default
    # double buffer is kept here for safety.
    agg_bytes = (3 * tk * tm * 2 + 2 * N_pad * C * 2 + 2 * tm * 4
                 + 2 * tm * K_pad * 4 + tm * C * 4)
    if not project_first:
        agg_bytes += 2 * (F_pad * K_pad * 4 + K_pad * 4)

    out_p = pl.pallas_call(
        functools.partial(_agg_kernel, apply_w=not project_first),
        out_shape=jax.ShapeDtypeStruct((N_pad, K_pad), jnp.float32),
        grid=(N_pad // tm, N_pad // tk),
        in_specs=in_specs,
        out_specs=pl.BlockSpec((tm, K_pad), lambda i, s: (i, 0)),
        scratch_shapes=[pltpu.VMEM((tm, C), jnp.float32)],
        compiler_params=pltpu.CompilerParams(
            dimension_semantics=("parallel", "arbitrary"),
            vmem_limit_bytes=_vmem_limit(agg_bytes)),
    )(*operands)

    return out_p[:N, :k]


def _reference(adj, feat, weight, bias, k):
    N, F = feat.shape
    in_deg = jnp.sum(adj.astype(jnp.float32), axis=0)
    norm = jnp.power(jnp.maximum(in_deg, 1.0), -0.5).reshape(N, 1)
    xn = feat * norm
    if F > k:
        h = xn @ weight.T + bias
        rst = adj.T.astype(jnp.float32) @ h
    else:
        rst = adj.T.astype(jnp.float32) @ xn
        rst = rst @ weight.T + bias
    return rst * norm


if __name__ == "__main__":
    def run_case(key, N, F, k, **tiles):
        k_adj, k_feat, k_w, k_b = jax.random.split(key, 4)
        adj = (jax.random.uniform(k_adj, (N, N)) < 0.3).astype(jnp.float32)
        feat = jax.random.normal(k_feat, (N, F), dtype=jnp.float32)
        weight = jax.random.normal(k_w, (k, F), dtype=jnp.float32) * 0.1
        bias = jax.random.normal(k_b, (k,), dtype=jnp.float32) * 0.01

        out = jax.block_until_ready(diff_pooling(adj, feat, weight, bias, k, **tiles))
        ref = _reference(adj, feat, weight, bias, k)
        assert out.shape == (N, k)
        # bf16 matmul operands (f32 accumulation) -> ~2e-3 relative error vs f32 ref.
        err = float(jnp.max(jnp.abs(out - ref)))
        assert jnp.allclose(out, ref, atol=1e-2, rtol=1e-2), (N, F, k, err)

    root = jax.random.PRNGKey(0)
    k1, k2, k3 = jax.random.split(root, 3)
    run_case(k1, 16, 32, 8)                      # F > k, single tile, heavy pad + masking
    run_case(k2, 300, 12, 24, tm=128, tk=128)    # F <= k branch, multi-tile, unaligned N
    run_case(k3, 512, 64, 8, tm=128, tk=256)     # F > k, multi-tile dst + reduction

    # TODO(synk): the original forward has no `return rst`; we return the computed rst.
    print("KERNEL_OK")
</pallas_src>

<mosaic_0001>
module attributes {stable_mosaic.version = 11 : i64} {
  func.func @_prep_adj_kernel(%arg0: i32, %arg1: i32, %arg2: memref<128x128xf32, #tpu.memory_space<vmem>>, %arg3: memref<128x128xbf16, #tpu.memory_space<vmem>>, %arg4: memref<1x128xf32, #tpu.memory_space<vmem>>) attributes {dimension_semantics = [#tpu.dimension_semantics<parallel>, #tpu.dimension_semantics<arbitrary>], iteration_bounds = array<i64: 1, 1>, scalar_prefetch = 0 : i64, scratch_operands = 0 : i64, tpu.core_type = #tpu.core_type<tc>, window_params = [{transform_indices = @transform_0, window_bounds = array<i64: 128, 128>}, {transform_indices = @transform_1, window_bounds = array<i64: 128, 128>}, {transform_indices = @transform_2, window_bounds = array<i64: 1, 128>}]} {
    %c0_i32 = arith.constant 0 : i32
    %0 = arith.cmpi eq, %arg1, %c0_i32 : i32
    %1 = arith.extui %0 : i1 to i32
    %c0_i32_0 = arith.constant 0 : i32
    %2 = arith.cmpi ne, %1, %c0_i32_0 : i32
    scf.if %2 {
      %cst_11 = arith.constant 0.000000e+00 : f32
      %26 = vector.broadcast %cst_11 : f32 to vector<1x128xf32>
      %c0_12 = arith.constant 0 : index
      %c0_13 = arith.constant 0 : index
      %27 = vector.load %arg4[%c0_12, %c0_13] : memref<1x128xf32, #tpu.memory_space<vmem>>, vector<1x128xf32>
      tpu.vector_store %arg4[%c0_12, %c0_13], %26 {strides = array<i32>} : memref<1x128xf32, #tpu.memory_space<vmem>>, vector<1x128xf32>,
    } else {
    }
    %c0 = arith.constant 0 : index
    %c0_1 = arith.constant 0 : index
    %3 = vector.load %arg2[%c0, %c0_1] : memref<128x128xf32, #tpu.memory_space<vmem>>, vector<128x128xf32>
    %c128_i32 = arith.constant 128 : i32
    %4 = arith.muli %arg1, %c128_i32 : i32
    %5 = tpu.iota {dimensions = array<i32: 0>} : vector<128x128xi32>
    %6 = vector.broadcast %4 : i32 to vector<128x128xi32>
    %7 = arith.addi %6, %5 : vector<128x128xi32>
    %c128_i32_2 = arith.constant 128 : i32
    %8 = arith.muli %arg0, %c128_i32_2 : i32
    %9 = tpu.iota {dimensions = array<i32: 1>} : vector<128x128xi32>
    %10 = vector.broadcast %8 : i32 to vector<128x128xi32>
    %11 = arith.addi %10, %9 : vector<128x128xi32>
    %c16_i32 = arith.constant 16 : i32
    %12 = vector.broadcast %c16_i32 : i32 to vector<128x128xi32>
    %13 = arith.cmpi slt, %7, %12 : vector<128x128xi32>
    %c16_i32_3 = arith.constant 16 : i32
    %14 = vector.broadcast %c16_i32_3 : i32 to vector<128x128xi32>
    %15 = arith.cmpi slt, %11, %14 : vector<128x128xi32>
    %16 = arith.andi %13, %15 : vector<128x128xi1>
    %cst = arith.constant 0.000000e+00 : f32
    %17 = vector.broadcast %cst : f32 to vector<128x128xf32>
    %18 = arith.select %16, %3, %17 : vector<128x128xi1>, vector<128x128xf32>
    %19 = arith.truncf %18 : vector<128x128xf32> to vector<128x128xbf16>
    %c0_4 = arith.constant 0 : index
    %c0_5 = arith.constant 0 : index
    %20 = vector.load %arg3[%c0_4, %c0_5] : memref<128x128xbf16, #tpu.memory_space<vmem>>, vector<128x128xbf16>
    tpu.vector_store %arg3[%c0_4, %c0_5], %19 {strides = array<i32>} : memref<128x128xbf16, #tpu.memory_space<vmem>>, vector<128x128xbf16>,
    %c0_6 = arith.constant 0 : index
    %c0_7 = arith.constant 0 : index
    %21 = vector.load %arg4[%c0_6, %c0_7] : memref<1x128xf32, #tpu.memory_space<vmem>>, vector<1x128xf32>
    %cst_8 = arith.constant dense<0.000000e+00> : vector<128xf32>
    %22 = vector.multi_reduction <add>, %18, %cst_8 [0] : vector<128x128xf32> to vector<128xf32>
    %23 = vector.shape_cast %22 : vector<128xf32> to vector<1x128xf32>
    %24 = arith.addf %21, %23 : vector<1x128xf32>
    %c0_9 = arith.constant 0 : index
    %c0_10 = arith.constant 0 : index
    %25 = vector.load %arg4[%c0_9, %c0_10] : memref<1x128xf32, #tpu.memory_space<vmem>>, vector<1x128xf32>
    tpu.vector_store %arg4[%c0_9, %c0_10], %24 {strides = array<i32>} : memref<1x128xf32, #tpu.memory_space<vmem>>, vector<1x128xf32>,
    return
  }
  func.func @transform_0(%arg0: i32, %arg1: i32) -> (i32, i32) {
    %c0_i32 = arith.constant 0 : i32
    %0 = arith.minsi %arg1, %c0_i32 : i32
    %c0_i32_0 = arith.constant 0 : i32
    %1 = arith.minsi %arg0, %c0_i32_0 : i32
    %c0_i32_1 = arith.constant 0 : i32
    return %0, %1 : i32, i32
  }
  func.func @transform_1(%arg0: i32, %arg1: i32) -> (i32, i32) {
    %c0_i32 = arith.constant 0 : i32
    return %arg1, %arg0 : i32, i32
  }
  func.func @transform_2(%arg0: i32, %arg1: i32) -> (i32, i32) {
    %c0_i32 = arith.constant 0 : i32
    %c0_i32_0 = arith.constant 0 : i32
    return %c0_i32, %arg0 : i32, i32
  }
}

</mosaic_0001>

<llo_original>
// kernel: tpu_custom_call.1
$region0: #{tpu_custom_call.1}
  #allocation0 [shape = 'u32[]', space=smem, size = 0x4, offset = 0x4, fixed_abs, tag = 'smem constant byte address 0x4 - core index']
  #allocation1 [shape = 'u32[144,128]{1,0:T(1,128)}', space=vmem, size = 0x12000, scoped, tag = 'internal scratch']
  %s0 = inlined_call_operand.hbm [shape: f32[16,16], index: 0, kind: input, shape index: {}]
  %s1 = inlined_call_operand.hbm [shape: bf16[128,128], index: 1, kind: output, shape index: {0}]
  %s2 = inlined_call_operand.hbm [shape: f32[1,128], index: 2, kind: output, shape index: {1}]
  %3 = xla_tuple %s1, %s2
  %s4 = sld [smem:[#allocation0]]
  $region30: #{tpu_custom_call.1} parent=0
    _
  %s6 = ssub.s32 1, %s4
  %s7 = scalar_select 0, %s6, %s4
  $region1: #{tpu_custom_call.1} parent=0
    #allocation2 [shape = 'u8[65536]{0}', space=vmem, size = 0x10000, scoped, tag = 'input window, operand 0, single buffered']
    #allocation3 [shape = 's32[1]{0}', space=sflag, size = 0x4, scoped, tag = 'scoped memory for tpu_custom_call.1']
    #allocation4 [shape = 's32[1]{0}', space=sflag, size = 0x4, scoped, tag = 'scoped memory for tpu_custom_call.1']
    #allocation5 [shape = 'u8[32768]{0}', space=vmem, size = 0x8000, scoped, tag = 'output window, operand 0, single buffered']
    #allocation6 [shape = 'u8[512]{0}', space=vmem, size = 0x400, scoped, tag = 'output window, operand 1, single buffered']
    #allocation7 [shape = 's32[1]{0}', space=sflag, size = 0x4, scoped, tag = 'scoped memory for tpu_custom_call.1']
    %8 = vsyncpa [#allocation3], 0
    %9 = vsyncpa [#allocation4], 0
    %10 = vsyncpa [#allocation7], 0
    // Predicated region
    $region2: #{tpu_custom_call.1} parent=1 // pred_check
      _
    $region3: #{tpu_custom_call.1} parent=1 // pred_check_branch
      %12 = sbr.rel (0) target = $region5
    $region4: #{tpu_custom_call.1} parent=1 // pred_region
      %s14 = ssub.s32 2048, 256
      %15 = vsyncadd [#allocation3], %s14
      %s16 = sshll.u32 [#allocation2], 4
      %s17 = int_to_ptr.vmem [resolvable:$true] %s16
      %22 = dma.hbm_to_vmem [thread:$0]  %s0, 256, %s17, [#allocation3], 128, 128, 8
    $region5: #{tpu_custom_call.1} parent=1 // pred_fallthru
      _
    // Predicated region
    $region6: #{tpu_custom_call.1} parent=1 // pred_check
      _
    $region7: #{tpu_custom_call.1} parent=1 // pred_check_branch
      %24 = sbr.rel (0) target = $region9
    $region8: #{tpu_custom_call.1} parent=1 // pred_region
      %25 = dma.done [#allocation3], 2048
    $region9: #{tpu_custom_call.1} parent=1 // pred_fallthru
      _
    %p26 = scmp.eq.s32.totalorder 0, 0
    // Predicated region
    $region10: #{tpu_custom_call.1} parent=1 // pred_check
      %p27 = pneg %p26
    $region11: #{tpu_custom_call.1} parent=1 // pred_check_branch
      %29 = sbr.rel (%p27) target = $region13
    $region12: #{tpu_custom_call.1} parent=1 // pred_region
      %30 = vst [vmem:[#allocation6] sm:$0x1] 0.0
    $region13: #{tpu_custom_call.1} parent=1 // pred_fallthru
      _
    %v31 = vld [vmem:[#allocation2] sm:$0xff]
    %v32 = vld [vmem:[#allocation2 + $0x8] sm:$0xff]
    %v33 = vld [vmem:[#allocation2 + $0x10] sm:$0xff]
    %v34 = vld [vmem:[#allocation2 + $0x18] sm:$0xff]
    %v35 = vld [vmem:[#allocation2 + $0x20] sm:$0xff]
    %v36 = vld [vmem:[#allocation2 + $0x28] sm:$0xff]
    %v37 = vld [vmem:[#allocation2 + $0x30] sm:$0xff]
    %v38 = vld [vmem:[#allocation2 + $0x38] sm:$0xff]
    %v39 = vld [vmem:[#allocation2 + $0x40] sm:$0xff]
    %v40 = vld [vmem:[#allocation2 + $0x48] sm:$0xff]
    %v41 = vld [vmem:[#allocation2 + $0x50] sm:$0xff]
    %v42 = vld [vmem:[#allocation2 + $0x58] sm:$0xff]
    %v43 = vld [vmem:[#allocation2 + $0x60] sm:$0xff]
    %v44 = vld [vmem:[#allocation2 + $0x68] sm:$0xff]
    %v45 = vld [vmem:[#allocation2 + $0x70] sm:$0xff]
    %v46 = vld [vmem:[#allocation2 + $0x78] sm:$0xff]
    %s47 = smul.u32 0, 128
    %v48 = vlaneseq
    %v49 = vshrl.u32 %v48, 7
    %v50 = vadd.s32 %v49, 8
    %v51 = vadd.s32 %v49, 16
    %v52 = vadd.s32 %v49, 24
    %v53 = vadd.s32 %v49, 32
    %v54 = vadd.s32 %v49, 40
    %v55 = vadd.s32 %v49, 48
    %v56 = vadd.s32 %v49, 56
    %v57 = vadd.s32 %v49, 64
    %v58 = vadd.s32 %v49, 72
    %v59 = vadd.s32 %v49, 80
    %v60 = vadd.s32 %v49, 88
    %v61 = vadd.s32 %v49, 96
    %v62 = vadd.s32 %v49, 104
    %v63 = vadd.s32 %v49, 112
    %v64 = vadd.s32 %v49, 120
    %v65 = vstv %s47
    %v66 = vadd.s32 %v65, %v49
    %v67 = vadd.s32 %v65, %v50
    %v68 = vadd.s32 %v65, %v51
    %v69 = vadd.s32 %v65, %v52
    %v70 = vadd.s32 %v65, %v53
    %v71 = vadd.s32 %v65, %v54
    %v72 = vadd.s32 %v65, %v55
    %v73 = vadd.s32 %v65, %v56
    %v74 = vadd.s32 %v65, %v57
    %v75 = vadd.s32 %v65, %v58
    %v76 = vadd.s32 %v65, %v59
    %v77 = vadd.s32 %v65, %v60
    %v78 = vadd.s32 %v65, %v61
    %v79 = vadd.s32 %v65, %v62
    %v80 = vadd.s32 %v65, %v63
    %v81 = vadd.s32 %v65, %v64
    %s82 = smul.u32 0, 128
    %v83 = vlaneseq
    %v84 = vand.u32 %v83, 127
    %v85 = vstv %s82
    %v86 = vadd.s32 %v85, %v84
    %vm87 = vcmp.lt.s32.totalorder %v66, 16
    %vm88 = vcmp.lt.s32.totalorder %v67, 16
    %vm89 = vcmp.lt.s32.totalorder %v68, 16
    %vm90 = vcmp.lt.s32.totalorder %v69, 16
    %vm91 = vcmp.lt.s32.totalorder %v70, 16
    %vm92 = vcmp.lt.s32.totalorder %v71, 16
    %vm93 = vcmp.lt.s32.totalorder %v72, 16
    %vm94 = vcmp.lt.s32.totalorder %v73, 16
    %vm95 = vcmp.lt.s32.totalorder %v74, 16
    %vm96 = vcmp.lt.s32.totalorder %v75, 16
    %vm97 = vcmp.lt.s32.totalorder %v76, 16
    %vm98 = vcmp.lt.s32.totalorder %v77, 16
    %vm99 = vcmp.lt.s32.totalorder %v78, 16
    %vm100 = vcmp.lt.s32.totalorder %v79, 16
    %vm101 = vcmp.lt.s32.totalorder %v80, 16
    %vm102 = vcmp.lt.s32.totalorder %v81, 16
    %vm103 = vcmp.lt.s32.totalorder %v86, 16
    %vm104 = vmand %vm87, %vm103
    %vm105 = vmand %vm88, %vm103
    %vm106 = vmand %vm89, %vm103
    %vm107 = vmand %vm90, %vm103
    %vm108 = vmand %vm91, %vm103
    %vm109 = vmand %vm92, %vm103
    %vm110 = vmand %vm93, %vm103
    %vm111 = vmand %vm94, %vm103
    %vm112 = vmand %vm95, %vm103
    %vm113 = vmand %vm96, %vm103
    %vm114 = vmand %vm97, %vm103
    %vm115 = vmand %vm98, %vm103
    %vm116 = vmand %vm99, %vm103
    %vm117 = vmand %vm100, %vm103
    %vm118 = vmand %vm101, %vm103
    %vm119 = vmand %vm102, %vm103
    %v120 = vsel %vm104, %v31, 0.0
    %v121 = vsel %vm105, %v32, 0.0
    %v122 = vsel %vm106, %v33, 0.0
    %v123 = vsel %vm107, %v34, 0.0
    %v124 = vsel %vm108, %v35, 0.0
    %v125 = vsel %vm109, %v36, 0.0
    %v126 = vsel %vm110, %v37, 0.0
    %v127 = vsel %vm111, %v38, 0.0
    %v128 = vsel %vm112, %v39, 0.0
    %v129 = vsel %vm113, %v40, 0.0
    %v130 = vsel %vm114, %v41, 0.0
    %v131 = vsel %vm115, %v42, 0.0
    %v132 = vsel %vm116, %v43, 0.0
    %v133 = vsel %vm117, %v44, 0.0
    %v134 = vsel %vm118, %v45, 0.0
    %v135 = vsel %vm119, %v46, 0.0
    %v136 = vpack.c.bf16 %v121, %v120
    %v137 = vpack.c.bf16 %v123, %v122
    %v138 = vpack.c.bf16 %v125, %v124
    %v139 = vpack.c.bf16 %v127, %v126
    %v140 = vpack.c.bf16 %v129, %v128
    %v141 = vpack.c.bf16 %v131, %v130
    %v142 = vpack.c.bf16 %v133, %v132
    %v143 = vpack.c.bf16 %v135, %v134
    %v152 = vunpack.c.l.b16 %v136
    %v153 = vunpack.c.h.b16 %v136
    %v154 = vunpack.c.l.b16 %v137
    %v155 = vunpack.c.h.b16 %v137
    %v156 = vunpack.c.l.b16 %v138
    %v157 = vunpack.c.h.b16 %v138
    %v158 = vunpack.c.l.b16 %v139
    %v159 = vunpack.c.h.b16 %v139
    %v160 = vunpack.c.l.b16 %v140
    %v161 = vunpack.c.h.b16 %v140
    %v162 = vunpack.c.l.b16 %v141
    %v163 = vunpack.c.h.b16 %v141
    %v164 = vunpack.c.l.b16 %v142
    %v165 = vunpack.c.h.b16 %v142
    %v166 = vunpack.c.l.b16 %v143
    %v167 = vunpack.c.h.b16 %v143
    %v168 = vpack.c.b16 %v152, %v152
    %v169 = vpack.c.b16 %v153, %v153
    %v170 = vpack.c.b16 %v154, %v154
    %v171 = vpack.c.b16 %v155, %v155
    %v172 = vpack.c.b16 %v156, %v156
    %v173 = vpack.c.b16 %v157, %v157
    %v174 = vpack.c.b16 %v158, %v158
    %v175 = vpack.c.b16 %v159, %v159
    %v176 = vpack.c.b16 %v160, %v160
    %v177 = vpack.c.b16 %v161, %v161
    %v178 = vpack.c.b16 %v162, %v162
    %v179 = vpack.c.b16 %v163, %v163
    %v180 = vpack.c.b16 %v164, %v164
    %v181 = vpack.c.b16 %v165, %v165
    %v182 = vpack.c.b16 %v166, %v166
    %v183 = vpack.c.b16 %v167, %v167
    %200 = vst [vmem:[#allocation5] sm:$0xf] %v168
    %201 = vst [vmem:[#allocation5 + $0x4] sm:$0xf] %v169
    %202 = vst [vmem:[#allocation5 + $0x8] sm:$0xf] %v170
    %203 = vst [vmem:[#allocation5 + $0xc] sm:$0xf] %v171
    %204 = vst [vmem:[#allocation5 + $0x10] sm:$0xf] %v172
    %205 = vst [vmem:[#allocation5 + $0x14] sm:$0xf] %v173
    %206 = vst [vmem:[#allocation5 + $0x18] sm:$0xf] %v174
    %207 = vst [vmem:[#allocation5 + $0x1c] sm:$0xf] %v175
    %208 = vst [vmem:[#allocation5 + $0x20] sm:$0xf] %v176
    %209 = vst [vmem:[#allocation5 + $0x24] sm:$0xf] %v177
    %210 = vst [vmem:[#allocation5 + $0x28] sm:$0xf] %v178
    %211 = vst [vmem:[#allocation5 + $0x2c] sm:$0xf] %v179
    %212 = vst [vmem:[#allocation5 + $0x30] sm:$0xf] %v180
    %213 = vst [vmem:[#allocation5 + $0x34] sm:$0xf] %v181
    %214 = vst [vmem:[#allocation5 + $0x38] sm:$0xf] %v182
    %215 = vst [vmem:[#allocation5 + $0x3c] sm:$0xf] %v183
    %v216 = vld [vmem:[#allocation6] sm:$0x1]
    %v217 = vadd.f32 %v120, %v121
    %v218 = vadd.f32 %v217, %v122
    %v219 = vadd.f32 %v218, %v123
    %v220 = vadd.f32 %v219, %v124
    %v221 = vadd.f32 %v220, %v125
    %v222 = vadd.f32 %v221, %v126
    %v223 = vadd.f32 %v222, %v127
    %v224 = vadd.f32 %v223, %v128
    %v225 = vadd.f32 %v224, %v129
    %v226 = vadd.f32 %v225, %v130
    %v227 = vadd.f32 %v226, %v131
    %v228 = vadd.f32 %v227, %v132
    %v229 = vadd.f32 %v228, %v133
    %v230 = vadd.f32 %v229, %v134
    %v231 = vadd.f32 %v230, %v135
    %v232 = vrot.slane %v231, 4
    %v233 = vadd.f32 %v231, %v232
    %v234 = vrot.slane %v233, 2
    %v235 = vadd.f32 %v233, %v234
    %v236 = vrot.slane %v235, 1
    %v237 = vadd.f32 %v235, %v236
    %v238 = vadd.f32 %v216, %v237
    %239 = vst [vmem:[#allocation6] sm:$0x1] %v238
    // Predicated region
    $region14: #{tpu_custom_call.1} parent=1 // pred_check
      _
    $region15: #{tpu_custom_call.1} parent=1 // pred_check_branch
      %241 = sbr.rel (0) target = $region17
    $region16: #{tpu_custom_call.1} parent=1 // pred_region
      %s243 = ssub.s32 1024, 1024
      %244 = vsyncadd [#allocation4], %s243
      %s245 = sshll.u32 [#allocation5], 4
      %s246 = int_to_ptr.vmem [resolvable:$true] %s245
      %251 = dma.vmem_to_hbm [thread:$0]  %s246, 1024, %s1, [#allocation4], 64, 64, 4
    $region17: #{tpu_custom_call.1} parent=1 // pred_fallthru
      _
    // Predicated region
    $region18: #{tpu_custom_call.1} parent=1 // pred_check
      _
    $region19: #{tpu_custom_call.1} parent=1 // pred_check_branch
      %253 = sbr.rel (0) target = $region21
    $region20: #{tpu_custom_call.1} parent=1 // pred_region
      %s255 = ssub.s32 16, 16
      %256 = vsyncadd [#allocation7], %s255
      %s258 = sshll.u32 [#allocation6], 4
      %s259 = int_to_ptr.vmem [resolvable:$true] %s258
      %261 = dma.vmem_to_hbm [thread:$0]  %s259, 16, %s2, [#allocation7]
    $region21: #{tpu_custom_call.1} parent=1 // pred_fallthru
      _
    // Predicated region
    $region22: #{tpu_custom_call.1} parent=1 // pred_check
      _
    $region23: #{tpu_custom_call.1} parent=1 // pred_check_branch
      %263 = sbr.rel (0) target = $region25
    $region24: #{tpu_custom_call.1} parent=1 // pred_region
      %264 = dma.done [#allocation4], 1024
    $region25: #{tpu_custom_call.1} parent=1 // pred_fallthru
      _
    // Predicated region
    $region26: #{tpu_custom_call.1} parent=1 // pred_check
      _
    $region27: #{tpu_custom_call.1} parent=1 // pred_check_branch
      %266 = sbr.rel (0) target = $region29
    $region28: #{tpu_custom_call.1} parent=1 // pred_region
      %267 = dma.done [#allocation7], 16
    $region29: #{tpu_custom_call.1} parent=1 // pred_fallthru
      _
    %268 = vsyncpa [#allocation3], 1
    %269 = vsyncpa [#allocation4], 1
    %270 = vsyncpa [#allocation7], 1

</llo_original>
